<compile_context>
chip_gen: v7x
topology: tpu7x:2x2x1
jax: 0.10.0
libtpu: 0.0.40
codegen_flags: <defaults>
</compile_context>

<pallas_src>
import functools
import math

import jax
import jax.numpy as jnp
from jax.experimental import pallas as pl
from jax.experimental.pallas import tpu as pltpu

LANE = 128       # lane width
SUBLANE_PAD = 16 # covers f32 (8) and bf16 (16) sublane packing


def _round_up(n: int, m: int) -> int:
    return ((n + m - 1) // m) * m


# --------------------------------------------------------------------------
# Kernel: fused Linear -> ReLU -> Linear for one feature (one grid step).
# Refs (feature axis squeezed away by BlockSpec):
#   x_ref : (B_pad, D)       bf16
#   w1_ref: (D, H_pad)       bf16
#   b1_ref: (1, H_pad)       f32
#   w2_ref: (H_pad, C_pad)   bf16
#   b2_ref: (1, C_pad)       f32
#   o_ref : (B_pad, C_pad)   f32   (lane-dense output slab)
# --------------------------------------------------------------------------
def _sep_mlp_fused_kernel(x_ref, w1_ref, b1_ref, w2_ref, b2_ref, o_ref):
    h = jnp.dot(x_ref[...], w1_ref[...], preferred_element_type=jnp.float32)
    h = jnp.maximum(h + b1_ref[...], 0.0)                       # ReLU, f32
    y = jnp.dot(h.astype(w2_ref.dtype), w2_ref[...],
                preferred_element_type=jnp.float32)
    o_ref[...] = (y + b2_ref[...]).astype(o_ref.dtype)


# --------------------------------------------------------------------------
# Parameter init (mirrors torch.nn.Linear default: uniform +-1/sqrt(fan_in)),
# kept per-feature in f32 so the reference stays exact.
# --------------------------------------------------------------------------
def init_sep_mlp_params(key, dim, categories, dtype=jnp.float32):
    params = []
    hidden = 5 * dim
    for cat in categories:
        k1, k2, k3, k4, key = jax.random.split(key, 5)
        bound1 = 1.0 / math.sqrt(dim)
        bound2 = 1.0 / math.sqrt(hidden)
        w1 = jax.random.uniform(k1, (dim, hidden), dtype, -bound1, bound1)
        b1 = jax.random.uniform(k2, (1, hidden), dtype, -bound1, bound1)
        w2 = jax.random.uniform(k3, (hidden, cat), dtype, -bound2, bound2)
        b2 = jax.random.uniform(k4, (1, cat), dtype, -bound2, bound2)
        params.append((w1, b1, w2, b2))
    return params


# --------------------------------------------------------------------------
# Stack + pad per-feature params into the kernel layout:
#   w1: (F, D, H_pad) bf16   b1: (F, 1, H_pad) f32
#   w2: (F, H_pad, C_pad) bf16   b2: (F, 1, C_pad) f32
# Padding columns/rows are zero so they cannot leak into the real logits.
# --------------------------------------------------------------------------
def stack_sep_mlp_params(params, compute_dtype=jnp.bfloat16):
    F = len(params)
    D, H = params[0][0].shape
    H_pad = _round_up(H, LANE)
    C_max = max(p[2].shape[1] for p in params)
    C_pad = _round_up(C_max, LANE)

    w1 = jnp.zeros((F, D, H_pad), compute_dtype)
    b1 = jnp.zeros((F, 1, H_pad), jnp.float32)
    w2 = jnp.zeros((F, H_pad, C_pad), compute_dtype)
    b2 = jnp.zeros((F, 1, C_pad), jnp.float32)
    for i, (w1_i, b1_i, w2_i, b2_i) in enumerate(params):
        c = w2_i.shape[1]
        w1 = w1.at[i, :, :H].set(w1_i.astype(compute_dtype))
        b1 = b1.at[i, :, :H].set(b1_i.astype(jnp.float32))
        w2 = w2.at[i, :H, :c].set(w2_i.astype(compute_dtype))
        b2 = b2.at[i, :, :c].set(b2_i.astype(jnp.float32))

    categories = tuple(int(p[2].shape[1]) for p in params)
    return (w1, b1, w2, b2), categories


# --------------------------------------------------------------------------
# Forward: single fused pallas_call over the feature grid.
# --------------------------------------------------------------------------
@functools.partial(jax.jit, static_argnames=("categories",))
def sep_mlp_forward(x, stacked_params, categories):
    """x: (B, F, D) f32 -> list of (B, categories[i]) f32 arrays."""
    w1, b1, w2, b2 = stacked_params
    B, F, D = x.shape
    assert F == w1.shape[0] and D == w1.shape[1]
    H_pad = w1.shape[2]
    C_pad = w2.shape[2]
    B_pad = max(_round_up(B, SUBLANE_PAD), SUBLANE_PAD)

    # One transpose (+ pad) instead of F per-feature HBM slices.
    xt = jnp.transpose(x, (1, 0, 2)).astype(w1.dtype)          # (F, B, D)
    if B_pad != B:
        xt = jnp.pad(xt, ((0, 0), (0, B_pad - B), (0, 0)))     # (F, B_pad, D)

    itemsize = lambda a: a.size * a.dtype.itemsize
    cost = pl.CostEstimate(
        flops=2 * F * B_pad * D * H_pad + 2 * F * B_pad * H_pad * C_pad,
        transcendentals=0,
        bytes_accessed=(itemsize(xt) + itemsize(w1) + itemsize(b1)
                        + itemsize(w2) + itemsize(b2)
                        + F * B_pad * C_pad * 4),
    )

    out = pl.pallas_call(
        _sep_mlp_fused_kernel,
        out_shape=jax.ShapeDtypeStruct((F, B_pad, C_pad), jnp.float32),
        grid_spec=pltpu.PrefetchScalarGridSpec(
            num_scalar_prefetch=0,
            grid=(F,),
            in_specs=[
                pl.BlockSpec((pl.Squeezed(), B_pad, D), lambda f: (f, 0, 0)),
                pl.BlockSpec((pl.Squeezed(), D, H_pad), lambda f: (f, 0, 0)),
                pl.BlockSpec((pl.Squeezed(), 1, H_pad), lambda f: (f, 0, 0)),
                pl.BlockSpec((pl.Squeezed(), H_pad, C_pad), lambda f: (f, 0, 0)),
                pl.BlockSpec((pl.Squeezed(), 1, C_pad), lambda f: (f, 0, 0)),
            ],
            out_specs=pl.BlockSpec((pl.Squeezed(), B_pad, C_pad),
                                   lambda f: (f, 0, 0)),
        ),
        compiler_params=pltpu.CompilerParams(
            dimension_semantics=("parallel",)),  # features shard across TCs on v7x
        cost_estimate=cost,
    )(xt, w1, b1, w2, b2)

    # Unpad: drop padded batch rows and padded category lanes per feature.
    return [out[i, :B, :c] for i, c in enumerate(categories)]


# --------------------------------------------------------------------------
# Pure-JAX f32 reference for correctness checking.
# --------------------------------------------------------------------------
def sep_mlp_reference(x, params):
    outs = []
    for i, (w1, b1, w2, b2) in enumerate(params):
        x_i = x[:, i, :]
        h = jnp.maximum(x_i @ w1 + b1, 0.0)
        outs.append(h @ w2 + b2)
    return outs


if __name__ == "__main__":
    # Small shapes consistent with the module: batch=2, len_feats=4, dim=32,
    # hidden=5*dim=160, per-feature category counts.
    B = 2
    dim = 32
    categories = [3, 5, 2, 7]
    F = len(categories)

    key = jax.random.PRNGKey(0)
    kx, kp = jax.random.split(key)
    x = jax.random.normal(kx, (B, F, dim), dtype=jnp.float32)

    params = init_sep_mlp_params(kp, dim, categories)
    stacked, cats = stack_sep_mlp_params(params)   # bf16 weights, f32 biases

    y_pred = sep_mlp_forward(x, stacked, cats)
    y_pred = [jax.block_until_ready(y) for y in y_pred]

    # Correctness vs. pure-f32 reference (loose tolerance: matmul inputs are
    # bf16-rounded, accumulation stays f32).
    y_ref = sep_mlp_reference(x, params)
    for i, (y, yr) in enumerate(zip(y_pred, y_ref)):
        assert y.shape == (B, categories[i]), (y.shape, (B, categories[i]))
        max_err = float(jnp.max(jnp.abs(y - yr)))
        assert jnp.allclose(y, yr, atol=5e-2, rtol=5e-2), (
            f"mismatch on feature {i}: max abs err {max_err}")

    print("KERNEL_OK")
</pallas_src>

<mosaic_0001>
module attributes {stable_mosaic.version = 11 : i64} {
  func.func @_sep_mlp_fused_kernel(%arg0: i32, %arg1: memref<1x16x32xbf16, #tpu.memory_space<vmem>>, %arg2: memref<1x32x256xbf16, #tpu.memory_space<vmem>>, %arg3: memref<1x1x256xf32, #tpu.memory_space<vmem>>, %arg4: memref<1x256x128xbf16, #tpu.memory_space<vmem>>, %arg5: memref<1x1x128xf32, #tpu.memory_space<vmem>>, %arg6: memref<1x16x128xf32, #tpu.memory_space<vmem>>) attributes {dimension_semantics = [#tpu.dimension_semantics<parallel>], iteration_bounds = array<i64: 4>, scalar_prefetch = 0 : i64, scratch_operands = 0 : i64, tpu.core_type = #tpu.core_type<tc>, window_params = [{transform_indices = @transform_0, window_bounds = array<i64: 1, 16, 32>}, {transform_indices = @transform_1, window_bounds = array<i64: 1, 32, 256>}, {transform_indices = @transform_2, window_bounds = array<i64: 1, 1, 256>}, {transform_indices = @transform_3, window_bounds = array<i64: 1, 256, 128>}, {transform_indices = @transform_4, window_bounds = array<i64: 1, 1, 128>}, {transform_indices = @transform_5, window_bounds = array<i64: 1, 16, 128>}]} {
    %c0 = arith.constant 0 : index
    %c0_0 = arith.constant 0 : index
    %c0_1 = arith.constant 0 : index
    %0 = vector.load %arg1[%c0, %c0_0, %c0_1] : memref<1x16x32xbf16, #tpu.memory_space<vmem>>, vector<1x16x32xbf16>
    %1 = vector.shape_cast %0 : vector<1x16x32xbf16> to vector<16x32xbf16>
    %c0_2 = arith.constant 0 : index
    %c0_3 = arith.constant 0 : index
    %c0_4 = arith.constant 0 : index
    %2 = vector.load %arg2[%c0_2, %c0_3, %c0_4] : memref<1x32x256xbf16, #tpu.memory_space<vmem>>, vector<1x32x256xbf16>
    %3 = vector.shape_cast %2 : vector<1x32x256xbf16> to vector<32x256xbf16>
    %cst = arith.constant dense<0.000000e+00> : vector<16x256xf32>
    %4 = tpu.matmul %1, %3, %cst {dimension_numbers = #tpu.dot_dimension_numbers<[1], [0], [0], [1], [0, 0, 1, 1], [], []>} : vector<16x32xbf16>, vector<32x256xbf16>, vector<16x256xf32> -> vector<16x256xf32>
    %c0_5 = arith.constant 0 : index
    %c0_6 = arith.constant 0 : index
    %c0_7 = arith.constant 0 : index
    %5 = vector.load %arg3[%c0_5, %c0_6, %c0_7] : memref<1x1x256xf32, #tpu.memory_space<vmem>>, vector<1x1x256xf32>
    %6 = vector.shape_cast %5 : vector<1x1x256xf32> to vector<1x256xf32>
    %7 = vector.broadcast %6 : vector<1x256xf32> to vector<16x256xf32>
    %8 = arith.addf %4, %7 : vector<16x256xf32>
    %cst_8 = arith.constant 0.000000e+00 : f32
    %9 = vector.broadcast %cst_8 : f32 to vector<16x256xf32>
    %10 = arith.maximumf %8, %9 : vector<16x256xf32>
    %11 = arith.truncf %10 : vector<16x256xf32> to vector<16x256xbf16>
    %c0_9 = arith.constant 0 : index
    %c0_10 = arith.constant 0 : index
    %c0_11 = arith.constant 0 : index
    %12 = vector.load %arg4[%c0_9, %c0_10, %c0_11] : memref<1x256x128xbf16, #tpu.memory_space<vmem>>, vector<1x256x128xbf16>
    %13 = vector.shape_cast %12 : vector<1x256x128xbf16> to vector<256x128xbf16>
    %cst_12 = arith.constant dense<0.000000e+00> : vector<16x128xf32>
    %14 = tpu.matmul %11, %13, %cst_12 {dimension_numbers = #tpu.dot_dimension_numbers<[1], [0], [0], [1], [0, 0, 1, 1], [], []>} : vector<16x256xbf16>, vector<256x128xbf16>, vector<16x128xf32> -> vector<16x128xf32>
    %c0_13 = arith.constant 0 : index
    %c0_14 = arith.constant 0 : index
    %c0_15 = arith.constant 0 : index
    %15 = vector.load %arg5[%c0_13, %c0_14, %c0_15] : memref<1x1x128xf32, #tpu.memory_space<vmem>>, vector<1x1x128xf32>
    %16 = vector.shape_cast %15 : vector<1x1x128xf32> to vector<1x128xf32>
    %17 = vector.broadcast %16 : vector<1x128xf32> to vector<16x128xf32>
    %18 = arith.addf %14, %17 : vector<16x128xf32>
    %c0_16 = arith.constant 0 : index
    %c0_17 = arith.constant 0 : index
    %c0_18 = arith.constant 0 : index
    %19 = vector.load %arg6[%c0_16, %c0_17, %c0_18] : memref<1x16x128xf32, #tpu.memory_space<vmem>>, vector<1x16x128xf32>
    %20 = vector.shape_cast %19 : vector<1x16x128xf32> to vector<16x128xf32>
    %21 = vector.shape_cast %18 : vector<16x128xf32> to vector<1x16x128xf32>
    tpu.vector_store %arg6[%c0_16, %c0_17, %c0_18], %21 {strides = array<i32>} : memref<1x16x128xf32, #tpu.memory_space<vmem>>, vector<1x16x128xf32>,
    return
  }
  func.func @transform_0(%arg0: i32) -> (i32, i32, i32) {
    %c0_i32 = arith.constant 0 : i32
    %c0_i32_0 = arith.constant 0 : i32
    %c0_i32_1 = arith.constant 0 : i32
    return %arg0, %c0_i32, %c0_i32_0 : i32, i32, i32
  }
  func.func @transform_1(%arg0: i32) -> (i32, i32, i32) {
    %c0_i32 = arith.constant 0 : i32
    %c0_i32_0 = arith.constant 0 : i32
    %c0_i32_1 = arith.constant 0 : i32
    return %arg0, %c0_i32, %c0_i32_0 : i32, i32, i32
  }
  func.func @transform_2(%arg0: i32) -> (i32, i32, i32) {
    %c0_i32 = arith.constant 0 : i32
    %c0_i32_0 = arith.constant 0 : i32
    %c0_i32_1 = arith.constant 0 : i32
    return %arg0, %c0_i32, %c0_i32_0 : i32, i32, i32
  }
  func.func @transform_3(%arg0: i32) -> (i32, i32, i32) {
    %c0_i32 = arith.constant 0 : i32
    %c0_i32_0 = arith.constant 0 : i32
    %c0_i32_1 = arith.constant 0 : i32
    return %arg0, %c0_i32, %c0_i32_0 : i32, i32, i32
  }
  func.func @transform_4(%arg0: i32) -> (i32, i32, i32) {
    %c0_i32 = arith.constant 0 : i32
    %c0_i32_0 = arith.constant 0 : i32
    %c0_i32_1 = arith.constant 0 : i32
    return %arg0, %c0_i32, %c0_i32_0 : i32, i32, i32
  }
  func.func @transform_5(%arg0: i32) -> (i32, i32, i32) {
    %c0_i32 = arith.constant 0 : i32
    %c0_i32_0 = arith.constant 0 : i32
    %c0_i32_1 = arith.constant 0 : i32
    return %arg0, %c0_i32, %c0_i32_0 : i32, i32, i32
  }
}

</mosaic_0001>

<llo_original>
// kernel: sep_mlp_forward.1
$region0: #{sep_mlp_forward.1}
  #allocation0 [shape = 'u32[]', space=smem, size = 0x4, offset = 0x4, fixed_abs, tag = 'smem constant byte address 0x4 - core index']
  #allocation1 [shape = 'u32[144,128]{1,0:T(1,128)}', space=vmem, size = 0x12000, scoped, tag = 'internal scratch']
  %s0 = inlined_call_operand.vmem [shape: bf16[4,16,32], index: 0, kind: input, shape index: {}]
  %s1 = inlined_call_operand.hbm [shape: bf16[4,32,256], index: 1, kind: input, shape index: {}]
  %s2 = inlined_call_operand.vmem [shape: f32[4,1,256], index: 2, kind: input, shape index: {}]
  %s3 = inlined_call_operand.hbm [shape: bf16[4,256,128], index: 3, kind: input, shape index: {}]
  %s4 = inlined_call_operand.vmem [shape: f32[4,1,128], index: 4, kind: input, shape index: {}]
  %s5 = inlined_call_operand.vmem [shape: f32[4,16,128], index: 5, kind: output, shape index: {}]
  %s6 = sld [smem:[#allocation0]]
  $region61: #{sep_mlp_forward.1} parent=0
    _
  %s8 = ssub.s32 1, %s6
  %s9 = scalar_select 0, %s8, %s6
  $region1: #{sep_mlp_forward.1} parent=0
    #allocation2 [shape = 'u8[32768]{0}', space=vmem, size = 0x8000, scoped, tag = 'input window, operand 1']
    #allocation3 [shape = 's32[2]{0}', space=sflag, size = 0x8, scoped, tag = 'scoped memory for sep_mlp_forward.1']
    #allocation4 [shape = 'u8[131072]{0}', space=vmem, size = 0x20000, scoped, tag = 'input window, operand 3']
    #allocation5 [shape = 's32[2]{0}', space=sflag, size = 0x8, scoped, tag = 'scoped memory for sep_mlp_forward.1']
    %10 = vsyncpa [#allocation3], 0
    %s11 = scalar_lea.sflag [#allocation3], 1
    %12 = vsyncpa %s11, 0
    %13 = vsyncpa [#allocation5], 0
    %s14 = scalar_lea.sflag [#allocation5], 1
    %15 = vsyncpa %s14, 0
    loop: start=0, step=1, limit=6
    $region2: #{sep_mlp_forward.1} parent=1 // loop_pre_header
      _
    $region3: #{sep_mlp_forward.1} parent=1 // loop_header
      %s17 = sphi 0, %s21
      %p18 = scmp.ge.s32.totalorder %s17, 6
      %s27 = sphi 0, %s29
      %s30 = sphi 0, %s27
      %s31 = sphi 0, %s30
      %s47 = sphi 0, %s31
      %s53 = sphi 0, %s55
      %s56 = sphi 0, %s53
      %s57 = sphi 0, %s56
      %s73 = sphi 0, %s57
      %s79 = sphi 0, %s81
      %s82 = sphi 0, %s79
      %s83 = sphi 0, %s82
      %s99 = sphi 0, %s83
      %s105 = sphi 0, %s107
      %s108 = sphi 0, %s105
      %s109 = sphi 0, %s108
      %s125 = sphi 0, %s109
      %s131 = sphi 0, %s133
      %s134 = sphi 0, %s131
      %s135 = sphi 0, %s134
      %s151 = sphi 0, %s135
      %s157 = sphi 0, %s159
      %s160 = sphi 0, %s157
      %s161 = sphi 0, %s160
      %s177 = sphi 0, %s161
    $region4: #{sep_mlp_forward.1} parent=1 // loop_header_branch
      %20 = sbr.rel (%p18) target = $region8
    $region5: #{sep_mlp_forward.1} parent=1 // loop_body
      %s22 = ssub.s32 %s17, 1
      %s23 = ssub.s32 %s17, 2
      %s24 = sadd.s32 %s17, 1
      %s25 = ssub.s32 %s17, %s24
      %p26 = scmp.eq.s32.totalorder %s25, 0
      %s28 = sadd.s32 %s27, 1
      %s29 = scalar_select %p26, %s27, %s28
      %p32 = pneg %p26
      %p33 = scmp.eq.s32.totalorder %s17, 3
      %p34 = por %p32, %p33
      %p35 = scmp.ne.s32.totalorder %s27, %s30
      %p36 = scmp.eq.s32.totalorder %s17, 0
      %p37 = por %p35, %p36
      %p38 = scmp.ne.s32.totalorder %s27, %s30
      %p39 = scmp.eq.s32.totalorder %s22, 3
      %p40 = por %p38, %p39
      %p41 = scmp.ne.s32.totalorder %s30, %s31
      %p42 = scmp.eq.s32.totalorder %s22, 0
      %p43 = por %p41, %p42
      %p44 = scmp.ne.s32.totalorder %s30, %s31
      %p45 = scmp.eq.s32.totalorder %s23, 3
      %p46 = por %p44, %p45
      %p48 = scmp.ne.s32.totalorder %s31, %s47
      %p49 = scmp.eq.s32.totalorder %s23, 0
      %p50 = por %p48, %p49
      %s51 = ssub.s32 %s17, %s24
      %p52 = scmp.eq.s32.totalorder %s51, 0
      %s54 = sadd.s32 %s53, 1
      %s55 = scalar_select %p52, %s53, %s54
      %p58 = pneg %p52
      %p59 = scmp.eq.s32.totalorder %s17, 3
      %p60 = por %p58, %p59
      %p61 = scmp.ne.s32.totalorder %s53, %s56
      %p62 = scmp.eq.s32.totalorder %s17, 0
      %p63 = por %p61, %p62
      %p64 = scmp.ne.s32.totalorder %s53, %s56
      %p65 = scmp.eq.s32.totalorder %s22, 3
      %p66 = por %p64, %p65
      %p67 = scmp.ne.s32.totalorder %s56, %s57
      %p68 = scmp.eq.s32.totalorder %s22, 0
      %p69 = por %p67, %p68
      %p70 = scmp.ne.s32.totalorder %s56, %s57
      %p71 = scmp.eq.s32.totalorder %s23, 3
      %p72 = por %p70, %p71
      %p74 = scmp.ne.s32.totalorder %s57, %s73
      %p75 = scmp.eq.s32.totalorder %s23, 0
      %p76 = por %p74, %p75
      %s77 = ssub.s32 %s17, %s24
      %p78 = scmp.eq.s32.totalorder %s77, 0
      %s80 = sadd.s32 %s79, 1
      %s81 = scalar_select %p78, %s79, %s80
      %p84 = pneg %p78
      %p85 = scmp.eq.s32.totalorder %s17, 3
      %p86 = por %p84, %p85
      %p87 = scmp.ne.s32.totalorder %s79, %s82
      %p88 = scmp.eq.s32.totalorder %s17, 0
      %p89 = por %p87, %p88
      %p90 = scmp.ne.s32.totalorder %s79, %s82
      %p91 = scmp.eq.s32.totalorder %s22, 3
      %p92 = por %p90, %p91
      %p93 = scmp.ne.s32.totalorder %s82, %s83
      %p94 = scmp.eq.s32.totalorder %s22, 0
      %p95 = por %p93, %p94
      %p96 = scmp.ne.s32.totalorder %s82, %s83
      %p97 = scmp.eq.s32.totalorder %s23, 3
      %p98 = por %p96, %p97
      %p100 = scmp.ne.s32.totalorder %s83, %s99
      %p101 = scmp.eq.s32.totalorder %s23, 0
      %p102 = por %p100, %p101
      %s103 = ssub.s32 %s17, %s24
      %p104 = scmp.eq.s32.totalorder %s103, 0
      %s106 = sadd.s32 %s105, 1
      %s107 = scalar_select %p104, %s105, %s106
      %p110 = pneg %p104
      %p111 = scmp.eq.s32.totalorder %s17, 3
      %p112 = por %p110, %p111
      %p113 = scmp.ne.s32.totalorder %s105, %s108
      %p114 = scmp.eq.s32.totalorder %s17, 0
      %p115 = por %p113, %p114
      %p116 = scmp.ne.s32.totalorder %s105, %s108
      %p117 = scmp.eq.s32.totalorder %s22, 3
      %p118 = por %p116, %p117
      %p119 = scmp.ne.s32.totalorder %s108, %s109
      %p120 = scmp.eq.s32.totalorder %s22, 0
      %p121 = por %p119, %p120
      %p122 = scmp.ne.s32.totalorder %s108, %s109
      %p123 = scmp.eq.s32.totalorder %s23, 3
      %p124 = por %p122, %p123
      %p126 = scmp.ne.s32.totalorder %s109, %s125
      %p127 = scmp.eq.s32.totalorder %s23, 0
      %p128 = por %p126, %p127
      %s129 = ssub.s32 %s17, %s24
      %p130 = scmp.eq.s32.totalorder %s129, 0
      %s132 = sadd.s32 %s131, 1
      %s133 = scalar_select %p130, %s131, %s132
      %p136 = pneg %p130
      %p137 = scmp.eq.s32.totalorder %s17, 3
      %p138 = por %p136, %p137
      %p139 = scmp.ne.s32.totalorder %s131, %s134
      %p140 = scmp.eq.s32.totalorder %s17, 0
      %p141 = por %p139, %p140
      %p142 = scmp.ne.s32.totalorder %s131, %s134
      %p143 = scmp.eq.s32.totalorder %s22, 3
      %p144 = por %p142, %p143
      %p145 = scmp.ne.s32.totalorder %s134, %s135
      %p146 = scmp.eq.s32.totalorder %s22, 0
      %p147 = por %p145, %p146
      %p148 = scmp.ne.s32.totalorder %s134, %s135
      %p149 = scmp.eq.s32.totalorder %s23, 3
      %p150 = por %p148, %p149
      %p152 = scmp.ne.s32.totalorder %s135, %s151
      %p153 = scmp.eq.s32.totalorder %s23, 0
      %p154 = por %p152, %p153
      %s155 = ssub.s32 %s17, %s24
      %p156 = scmp.eq.s32.totalorder %s155, 0
      %s158 = sadd.s32 %s157, 1
      %s159 = scalar_select %p156, %s157, %s158
      %p162 = pneg %p156
      %p163 = scmp.eq.s32.totalorder %s17, 3
      %p164 = por %p162, %p163
      %p165 = scmp.ne.s32.totalorder %s157, %s160
      %p166 = scmp.eq.s32.totalorder %s17, 0
      %p167 = por %p165, %p166
      %p168 = scmp.ne.s32.totalorder %s157, %s160
      %p169 = scmp.eq.s32.totalorder %s22, 3
      %p170 = por %p168, %p169
      %p171 = scmp.ne.s32.totalorder %s160, %s161
      %p172 = scmp.eq.s32.totalorder %s22, 0
      %p173 = por %p171, %p172
      %p174 = scmp.ne.s32.totalorder %s160, %s161
      %p175 = scmp.eq.s32.totalorder %s23, 3
      %p176 = por %p174, %p175
      %p178 = scmp.ne.s32.totalorder %s161, %s177
      %p179 = scmp.eq.s32.totalorder %s23, 0
      %p180 = por %p178, %p179
      %p181 = scmp.le.s32.totalorder 1, %s17
      %p182 = scmp.lt.s32.totalorder %s17, 5
      %p183 = pnand %p181, %p182
      %p184 = pneg %p183
      // Predicated region
      $region9: #{sep_mlp_forward.1} parent=5 // pred_check
        _
      $region10: #{sep_mlp_forward.1} parent=5 // pred_check_branch
        %186 = sbr.rel (%p183) target = $region12
      $region11: #{sep_mlp_forward.1} parent=5 // pred_region
        %s187 = ssub.s32 %s17, 1
      $region12: #{sep_mlp_forward.1} parent=5 // pred_fallthru
        _
      %p188 = scmp.lt.s32.totalorder %s17, 4
      // Predicated region
      $region13: #{sep_mlp_forward.1} parent=5 // pred_check
        %p189 = pneg %p188
      $region14: #{sep_mlp_forward.1} parent=5 // pred_check_branch
        %191 = sbr.rel (%p189) target = $region16
      $region15: #{sep_mlp_forward.1} parent=5 // pred_region
        // Predicated region
        $region17: #{sep_mlp_forward.1} parent=15 // pred_check
          %p192 = pneg %p37
        $region18: #{sep_mlp_forward.1} parent=15 // pred_check_branch
          %194 = sbr.rel (%p192) target = $region20
        $region19: #{sep_mlp_forward.1} parent=15 // pred_region
          %p195 = scmp.lt.s32.totalorder %s17, 3
          %s196 = scalar_select %p195, %s17, 3
          %s197 = smul.addr %s196, 2
          %s198 = smul.addr %s197, 4
          %s199 = scalar_lea.vmem %s0, %s198
        $region20: #{sep_mlp_forward.1} parent=15 // pred_fallthru
          _
        // Predicated region
        $region21: #{sep_mlp_forward.1} parent=15 // pred_check
          %p200 = pneg %p63
        $region22: #{sep_mlp_forward.1} parent=15 // pred_check_branch
          %202 = sbr.rel (%p200) target = $region24
        $region23: #{sep_mlp_forward.1} parent=15 // pred_region
          %s203 = sand.u32 %s53, 1
          %s204 = scalar_lea.sflag [#allocation3], %s203
          %s205 = sand.u32 %s53, 1
          %s206 = smul.addr %s205, 32
          %s207 = scalar_lea.vmem [#allocation2], %s206
          %s209 = ssub.s32 512, 512
          %210 = vsyncadd %s204, %s209
          %s211 = smul.addr %s17, 8
          %s212 = smul.addr %s211, 64
          %s213 = scalar_lea.hbm %s1, %s212
          %s214 = sshll.u32 %s207, 4
          %s215 = int_to_ptr.vmem [resolvable:$true] %s214
          %220 = dma.hbm_to_vmem [thread:$0]  %s213, 512, %s215, %s204, 128, 128, 8
        $region24: #{sep_mlp_forward.1} parent=15 // pred_fallthru
          _
        // Predicated region
        $region25: #{sep_mlp_forward.1} parent=15 // pred_check
          %p221 = pneg %p89
        $region26: #{sep_mlp_forward.1} parent=15 // pred_check_branch
          %223 = sbr.rel (%p221) target = $region28
        $region27: #{sep_mlp_forward.1} parent=15 // pred_region
          %p224 = scmp.lt.s32.totalorder %s17, 3
          %s225 = scalar_select %p224, %s17, 3
          %s226 = smul.addr %s225, 2
          %s227 = scalar_lea.vmem %s2, %s226
        $region28: #{sep_mlp_forward.1} parent=15 // pred_fallthru
          _
        // Predicated region
        $region29: #{sep_mlp_forward.1} parent=15 // pred_check
          %p228 = pneg %p115
        $region30: #{sep_mlp_forward.1} parent=15 // pred_check_branch
          %230 = sbr.rel (%p228) target = $region32
        $region31: #{sep_mlp_forward.1} parent=15 // pred_region
          %s231 = sand.u32 %s105, 1
          %s232 = scalar_lea.sflag [#allocation5], %s231
          %s233 = sand.u32 %s105, 1
          %s234 = smul.addr %s233, 128
          %s235 = scalar_lea.vmem [#allocation4], %s234
          %s237 = ssub.s32 2048, 2048
          %238 = vsyncadd %s232, %s237
          %s239 = smul.addr %s17, 32
          %s240 = smul.addr %s239, 64
          %s241 = scalar_lea.hbm %s3, %s240
          %s242 = sshll.u32 %s235, 4
          %s243 = int_to_ptr.vmem [resolvable:$true] %s242
          %248 = dma.hbm_to_vmem [thread:$0]  %s241, 2048, %s243, %s232, 64, 64, 4
        $region32: #{sep_mlp_forward.1} parent=15 // pred_fallthru
          _
        // Predicated region
        $region33: #{sep_mlp_forward.1} parent=15 // pred_check
          %p249 = pneg %p141
        $region34: #{sep_mlp_forward.1} parent=15 // pred_check_branch
          %251 = sbr.rel (%p249) target = $region36
        $region35: #{sep_mlp_forward.1} parent=15 // pred_region
          %p252 = scmp.lt.s32.totalorder %s17, 3
          %s253 = scalar_select %p252, %s17, 3
          %s254 = scalar_lea.vmem %s4, %s253
        $region36: #{sep_mlp_forward.1} parent=15 // pred_fallthru
          _
      $region16: #{sep_mlp_forward.1} parent=5 // pred_fallthru
        _
      %p255 = scmp.le.s32.totalorder 1, %s17
      %p256 = scmp.lt.s32.totalorder %s17, 5
      %p257 = pnand %p255, %p256
      %p258 = pneg %p257
      // Predicated region
      $region37: #{sep_mlp_forward.1} parent=5 // pred_check
        _
      $region38: #{sep_mlp_forward.1} parent=5 // pred_check_branch
        %260 = sbr.rel (%p257) target = $region40
      $region39: #{sep_mlp_forward.1} parent=5 // pred_region
        %s261 = ssub.s32 %s17, 1
        %s262 = sand.u32 %s56, 1
        %s263 = scalar_lea.sflag [#allocation3], %s262
        %s264 = sand.u32 %s56, 1
        %s265 = smul.addr %s264, 32
        %s266 = scalar_lea.vmem [#allocation2], %s265
        // Predicated region
        $region41: #{sep_mlp_forward.1} parent=39 // pred_check
          %p267 = pneg %p69
        $region42: #{sep_mlp_forward.1} parent=39 // pred_check_branch
          %269 = sbr.rel (%p267) target = $region44
        $region43: #{sep_mlp_forward.1} parent=39 // pred_region
          %270 = dma.done %s263, 512
        $region44: #{sep_mlp_forward.1} parent=39 // pred_fallthru
          _
        %s271 = sand.u32 %s108, 1
        %s272 = scalar_lea.sflag [#allocation5], %s271
        %s273 = sand.u32 %s108, 1
        %s274 = smul.addr %s273, 128
        %s275 = scalar_lea.vmem [#allocation4], %s274
        // Predicated region
        $region45: #{sep_mlp_forward.1} parent=39 // pred_check
          %p276 = pneg %p121
        $region46: #{sep_mlp_forward.1} parent=39 // pred_check_branch
          %278 = sbr.rel (%p276) target = $region48
        $region47: #{sep_mlp_forward.1} parent=39 // pred_region
          %279 = dma.done %s272, 2048
        $region48: #{sep_mlp_forward.1} parent=39 // pred_fallthru
          _
        %p280 = scmp.lt.s32.totalorder %s22, 3
        %s281 = scalar_select %p280, %s22, 3
        %s282 = smul.addr %s281, 2
        %s283 = smul.addr %s282, 4
        %s284 = scalar_lea.vmem %s0, %s283
        %p285 = pneg %p43
        %p286 = pneg %p40
        %s287 = sand.u32 %s56, 1
        %s288 = scalar_lea.sflag [#allocation3], %s287
        %s289 = sand.u32 %s56, 1
        %s290 = smul.addr %s289, 32
        %s291 = scalar_lea.vmem [#allocation2], %s290
        %p292 = pneg %p69
        %p293 = pneg %p66
        %p294 = scmp.lt.s32.totalorder %s22, 3
        %s295 = scalar_select %p294, %s22, 3
        %s296 = smul.addr %s295, 2
        %s297 = scalar_lea.vmem %s2, %s296
        %p298 = pneg %p95
        %p299 = pneg %p92
        %s300 = sand.u32 %s108, 1
        %s301 = scalar_lea.sflag [#allocation5], %s300
        %s302 = sand.u32 %s108, 1
        %s303 = smul.addr %s302, 128
        %s304 = scalar_lea.vmem [#allocation4], %s303
        %p305 = pneg %p121
        %p306 = pneg %p118
        %p307 = scmp.lt.s32.totalorder %s22, 3
        %s308 = scalar_select %p307, %s22, 3
        %s309 = scalar_lea.vmem %s4, %s308
        %p310 = pneg %p147
        %p311 = pneg %p144
        %p312 = pneg %p173
        %p313 = pneg %p170
        %p314 = scmp.lt.s32.totalorder %s22, 3
        %s315 = scalar_select %p314, %s22, 3
        %s316 = smul.addr %s315, 2
        %s317 = smul.addr %s316, 8
        %s318 = scalar_lea.vmem %s5, %s317
        %p319 = scmp.lt.s32.totalorder %s22, 3
        %s320 = scalar_select %p319, %s22, 3
        %s321 = smul.addr %s320, 2
        %s322 = smul.addr %s321, 4
        %s323 = scalar_lea.vmem %s0, %s322
        %p324 = scmp.lt.s32.totalorder %s22, 3
        %s325 = scalar_select %p324, %s22, 3
        %s326 = smul.addr %s325, 2
        %s327 = scalar_lea.vmem %s2, %s326
        %p328 = scmp.lt.s32.totalorder %s22, 3
        %s329 = scalar_select %p328, %s22, 3
        %s330 = scalar_lea.vmem %s4, %s329
        %p331 = scmp.lt.s32.totalorder %s22, 3
        %s332 = scalar_select %p331, %s22, 3
        %s333 = smul.addr %s332, 2
        %s334 = smul.addr %s333, 8
        %s335 = scalar_lea.vmem %s5, %s334
        %v337 = vld [vmem:[%s323] sm:$0xf]
        %v338 = vld [vmem:[%s323 + $0x4] sm:$0xf]
        %v339 = vld [vmem:[%s266] sm:$0xff]
        %v340 = vld [vmem:[%s266 + $0x8] sm:$0xff]
        %v341 = vld [vmem:[%s266 + $0x10] sm:$0xff]
        %v342 = vld [vmem:[%s266 + $0x18] sm:$0xff]
        %v343 = vld [vmem:[%s327] sm:$0x3]
        %v345 = vlaneseq
        %v346 = vshrl.u32 %v345, 7
        %v347 = vsub.s32 0, %v346
        %v348 = vrot.slane %v343, %v347
        %v349 = vlaneseq
        %v350 = vshrl.u32 %v349, 7
        %v351 = vsub.s32 1, %v350
        %v352 = vrot.slane %v343, %v351
        %v357 = vunpack.c.l.b16 %v337
        %v358 = vunpack.c.l.b16 %v338
        %v359 = vpack.c.b16 %v358, %v357
        %v364 = vunpack.c.l.b16 %v339
        %v365 = vunpack.c.h.b16 %v339
        %v366 = vunpack.c.l.b16 %v340
        %v367 = vunpack.c.h.b16 %v340
        %v368 = vunpack.c.l.b16 %v341
        %v369 = vunpack.c.h.b16 %v341
        %v370 = vunpack.c.l.b16 %v342
        %v371 = vunpack.c.h.b16 %v342
        %v372 = vpack.c.b16 %v366, %v364
        %v373 = vpack.c.b16 %v367, %v365
        %v374 = vpack.c.b16 %v370, %v368
        %v375 = vpack.c.b16 %v371, %v369
        %vm380 = vcmask 261120
        %v382 = vsel %vm380, %v359, 0
        %384 = vmatprep.subr.bf16.mxu0 %v373
        %385 = vmatpush1.bf16.msra.mxu0 %v372
        %386 = vmatprep.subr.bf16.mxu0 %v375
        %387 = vmatpush1.bf16.msra.mxu0 %v374
        %388 = vmatprep.subr.bf16.mxu0 0
        %389 = vmatpush1.bf16.msra.mxu0 0
        %390 = vmatprep.subr.bf16.mxu0 0
        %391 = vmatpush1.bf16.msra.mxu0 0
        %392 = vmatprep.subr.bf16.mxu0 0
        %393 = vmatpush1.bf16.msra.mxu0 0
        %394 = vmatprep.subr.bf16.mxu0 0
        %395 = vmatpush1.bf16.msra.mxu0 0
        %396 = vmatprep.subr.bf16.mxu0 0
        %397 = vmatpush1.bf16.msra.mxu0 0
        %398 = vmatprep.subr.bf16.mxu0 0
        %399 = vmatpush1.bf16.msra.mxu0 0
        %400 = vmatprep.subr.bf16.mxu0 0
        %401 = vmatpush1.bf16.msra.mxu0 0
        %402 = vmatprep.subr.bf16.mxu0 0
        %403 = vmatpush1.bf16.msra.mxu0 0
        %404 = vmatprep.subr.bf16.mxu0 0
        %405 = vmatpush1.bf16.msra.mxu0 0
        %406 = vmatprep.subr.bf16.mxu0 0
        %407 = vmatpush1.bf16.msra.mxu0 0
        %408 = vmatprep.subr.bf16.mxu0 0
        %409 = vmatpush1.bf16.msra.mxu0 0
        %410 = vmatprep.subr.bf16.mxu0 0
        %411 = vmatpush1.bf16.msra.mxu0 0
        %412 = vmatprep.subr.bf16.mxu0 0
        %413 = vmatpush1.bf16.msra.mxu0 0
        %414 = vmatprep.subr.bf16.mxu0 0
        %415 = vmatpush1.bf16.msra.mxu0 0
        %416 = vmatprep.mubr.bf16.mxu0 0
        %417 = vmatmul.mubr.bf16.gmra.mrb[0].mxu0 %v382
        %v418 = vpop.f32.mrb[0].mxu0
        %v419 = vadd.f32 %v348, %v418
        %v420 = vpop.f32.mrb[0].mxu0
        %v421 = vadd.f32 %v352, %v420
        %v422 = vpop.f32.mrb[0].mxu0
        %v423 = vadd.f32 %v348, %v422
        %v424 = vpop.f32.mrb[0].mxu0
        %v425 = vadd.f32 %v352, %v424
        %426 = vdwg.mxu0
        %v427 = vmax.f32 %v419, 0.0
        %v428 = vmax.f32 %v421, 0.0
        %v429 = vmax.f32 %v423, 0.0
        %v430 = vmax.f32 %v425, 0.0
        %v431 = vpack.c.bf16 %v429, %v427
        %v432 = vpack.c.bf16 %v430, %v428
        %v433 = vld [vmem:[%s275] sm:$0xf]
        %v434 = vld [vmem:[%s275 + $0x4] sm:$0xf]
        %v435 = vld [vmem:[%s275 + $0x8] sm:$0xf]
        %v436 = vld [vmem:[%s275 + $0xc] sm:$0xf]
        %v437 = vld [vmem:[%s275 + $0x10] sm:$0xf]
        %v438 = vld [vmem:[%s275 + $0x14] sm:$0xf]
        %v439 = vld [vmem:[%s275 + $0x18] sm:$0xf]
        %v440 = vld [vmem:[%s275 + $0x1c] sm:$0xf]
        %v441 = vld [vmem:[%s275 + $0x20] sm:$0xf]
        %v442 = vld [vmem:[%s275 + $0x24] sm:$0xf]
        %v443 = vld [vmem:[%s275 + $0x28] sm:$0xf]
        %v444 = vld [vmem:[%s275 + $0x2c] sm:$0xf]
        %v445 = vld [vmem:[%s275 + $0x30] sm:$0xf]
        %v446 = vld [vmem:[%s275 + $0x34] sm:$0xf]
        %v447 = vld [vmem:[%s275 + $0x38] sm:$0xf]
        %v448 = vld [vmem:[%s275 + $0x3c] sm:$0xf]
        %v449 = vld [vmem:[%s275 + $0x40] sm:$0xf]
        %v450 = vld [vmem:[%s275 + $0x44] sm:$0xf]
        %v451 = vld [vmem:[%s275 + $0x48] sm:$0xf]
        %v452 = vld [vmem:[%s275 + $0x4c] sm:$0xf]
        %v453 = vld [vmem:[%s275 + $0x50] sm:$0xf]
        %v454 = vld [vmem:[%s275 + $0x54] sm:$0xf]
        %v455 = vld [vmem:[%s275 + $0x58] sm:$0xf]
        %v456 = vld [vmem:[%s275 + $0x5c] sm:$0xf]
        %v457 = vld [vmem:[%s275 + $0x60] sm:$0xf]
        %v458 = vld [vmem:[%s275 + $0x64] sm:$0xf]
        %v459 = vld [vmem:[%s275 + $0x68] sm:$0xf]
        %v460 = vld [vmem:[%s275 + $0x6c] sm:$0xf]
        %v461 = vld [vmem:[%s275 + $0x70] sm:$0xf]
        %v462 = vld [vmem:[%s275 + $0x74] sm:$0xf]
        %v463 = vld [vmem:[%s275 + $0x78] sm:$0xf]
        %v464 = vld [vmem:[%s275 + $0x7c] sm:$0xf]
        %v465 = vld [vmem:[%s330] sm:$0x1]
        %v467 = vlaneseq
        %v468 = vshrl.u32 %v467, 7
        %v469 = vsub.s32 0, %v468
        %v470 = vrot.slane %v465, %v469
        %v504 = vunpack.c.l.b16 %v433
        %v505 = vunpack.c.l.b16 %v434
        %v506 = vunpack.c.l.b16 %v435
        %v507 = vunpack.c.l.b16 %v436
        %v508 = vunpack.c.l.b16 %v437
        %v509 = vunpack.c.l.b16 %v438
        %v510 = vunpack.c.l.b16 %v439
        %v511 = vunpack.c.l.b16 %v440
        %v512 = vunpack.c.l.b16 %v441
        %v513 = vunpack.c.l.b16 %v442
        %v514 = vunpack.c.l.b16 %v443
        %v515 = vunpack.c.l.b16 %v444
        %v516 = vunpack.c.l.b16 %v445
        %v517 = vunpack.c.l.b16 %v446
        %v518 = vunpack.c.l.b16 %v447
        %v519 = vunpack.c.l.b16 %v448
        %v520 = vunpack.c.l.b16 %v449
        %v521 = vunpack.c.l.b16 %v450
        %v522 = vunpack.c.l.b16 %v451
        %v523 = vunpack.c.l.b16 %v452
        %v524 = vunpack.c.l.b16 %v453
        %v525 = vunpack.c.l.b16 %v454
        %v526 = vunpack.c.l.b16 %v455
        %v527 = vunpack.c.l.b16 %v456
        %v528 = vunpack.c.l.b16 %v457
        %v529 = vunpack.c.l.b16 %v458
        %v530 = vunpack.c.l.b16 %v459
        %v531 = vunpack.c.l.b16 %v460
        %v532 = vunpack.c.l.b16 %v461
        %v533 = vunpack.c.l.b16 %v462
        %v534 = vunpack.c.l.b16 %v463
        %v535 = vunpack.c.l.b16 %v464
        %v536 = vpack.c.b16 %v505, %v504
        %v537 = vpack.c.b16 %v507, %v506
        %v538 = vpack.c.b16 %v509, %v508
        %v539 = vpack.c.b16 %v511, %v510
        %v540 = vpack.c.b16 %v513, %v512
        %v541 = vpack.c.b16 %v515, %v514
        %v542 = vpack.c.b16 %v517, %v516
        %v543 = vpack.c.b16 %v519, %v518
        %v544 = vpack.c.b16 %v521, %v520
        %v545 = vpack.c.b16 %v523, %v522
        %v546 = vpack.c.b16 %v525, %v524
        %v547 = vpack.c.b16 %v527, %v526
        %v548 = vpack.c.b16 %v529, %v528
        %v549 = vpack.c.b16 %v531, %v530
        %v550 = vpack.c.b16 %v533, %v532
        %v551 = vpack.c.b16 %v535, %v534
        %568 = vmatprep.subr.bf16.mxu0 0
        %569 = vmatpush1.bf16.msra.mxu0 %v536
        %570 = vmatprep.subr.bf16.mxu0 0
        %571 = vmatpush1.bf16.msra.mxu0 %v537
        %572 = vmatprep.subr.bf16.mxu0 0
        %573 = vmatpush1.bf16.msra.mxu0 %v538
        %574 = vmatprep.subr.bf16.mxu0 0
        %575 = vmatpush1.bf16.msra.mxu0 %v539
        %576 = vmatprep.subr.bf16.mxu0 0
        %577 = vmatpush1.bf16.msra.mxu0 %v540
        %578 = vmatprep.subr.bf16.mxu0 0
        %579 = vmatpush1.bf16.msra.mxu0 %v541
        %580 = vmatprep.subr.bf16.mxu0 0
        %581 = vmatpush1.bf16.msra.mxu0 %v542
        %582 = vmatprep.subr.bf16.mxu0 0
        %583 = vmatpush1.bf16.msra.mxu0 %v543
        %584 = vmatprep.subr.bf16.mxu0 0
        %585 = vmatpush1.bf16.msra.mxu0 %v544
        %586 = vmatprep.subr.bf16.mxu0 0
        %587 = vmatpush1.bf16.msra.mxu0 %v545
        %588 = vmatprep.subr.bf16.mxu0 0
        %589 = vmatpush1.bf16.msra.mxu0 %v546
        %590 = vmatprep.subr.bf16.mxu0 0
        %591 = vmatpush1.bf16.msra.mxu0 %v547
        %592 = vmatprep.subr.bf16.mxu0 0
        %593 = vmatpush1.bf16.msra.mxu0 %v548
        %594 = vmatprep.subr.bf16.mxu0 0
        %595 = vmatpush1.bf16.msra.mxu0 %v549
        %596 = vmatprep.subr.bf16.mxu0 0
        %597 = vmatpush1.bf16.msra.mxu0 %v550
        %598 = vmatprep.subr.bf16.mxu0 0
        %599 = vmatpush1.bf16.msra.mxu0 %v551
        %600 = vmatprep.mubr.bf16.mxu0 %v432
        %601 = vmatmul.mubr.bf16.gmra.mrb[0].mxu0 %v431
        %v602 = vpop.f32.mrb[0].mxu0
        %v603 = vadd.f32 %v470, %v602
        %v604 = vpop.f32.mrb[0].mxu0
        %v605 = vpop.f32.mrb[0].mxu0
        %v606 = vadd.f32 %v470, %v605
        %v607 = vpop.f32.mrb[0].mxu0
        %608 = vdwg.mxu0
        %609 = vst [vmem:[%s335] sm:$0xff] %v603
        %610 = vst [vmem:[%s335 + $0x8] sm:$0xff] %v606
        %p611 = scmp.lt.s32.totalorder %s22, 3
        %s612 = scalar_select %p611, %s22, 3
        %s613 = smul.addr %s612, 2
        %s614 = smul.addr %s613, 8
        %s615 = scalar_lea.vmem %s5, %s614
        // Predicated region
        $region49: #{sep_mlp_forward.1} parent=39 // pred_check
          %p616 = pneg %p170
        $region50: #{sep_mlp_forward.1} parent=39 // pred_check_branch
          %618 = sbr.rel (%p616) target = $region52
        $region51: #{sep_mlp_forward.1} parent=39 // pred_region
          _
        $region52: #{sep_mlp_forward.1} parent=39 // pred_fallthru
          _
      $region40: #{sep_mlp_forward.1} parent=5 // pred_fallthru
        _
      %p619 = scmp.le.s32.totalorder 2, %s17
      // Predicated region
      $region53: #{sep_mlp_forward.1} parent=5 // pred_check
        %p620 = pneg %p619
      $region54: #{sep_mlp_forward.1} parent=5 // pred_check_branch
        %622 = sbr.rel (%p620) target = $region56
      $region55: #{sep_mlp_forward.1} parent=5 // pred_region
        %s623 = ssub.s32 %s17, 2
        // Predicated region
        $region57: #{sep_mlp_forward.1} parent=55 // pred_check
          %p624 = pneg %p176
        $region58: #{sep_mlp_forward.1} parent=55 // pred_check_branch
          %626 = sbr.rel (%p624) target = $region60
        $region59: #{sep_mlp_forward.1} parent=55 // pred_region
          %p627 = scmp.lt.s32.totalorder %s23, 3
          %s628 = scalar_select %p627, %s23, 3
          %s629 = smul.addr %s628, 2
          %s630 = smul.addr %s629, 8
          %s631 = scalar_lea.vmem %s5, %s630
        $region60: #{sep_mlp_forward.1} parent=55 // pred_fallthru
          _
      $region56: #{sep_mlp_forward.1} parent=5 // pred_fallthru
        _
    $region6: #{sep_mlp_forward.1} parent=1 // loop_footer
      %s21 = sadd.s32 1, %s17
    $region7: #{sep_mlp_forward.1} parent=1 // loop_footer_branch
      %16 = sbr.rel target = $region3
    $region8: #{sep_mlp_forward.1} parent=1 // loop_exit
      _
    %632 = vsyncpa [#allocation3], 1
    %s633 = scalar_lea.sflag [#allocation3], 1
    %634 = vsyncpa %s633, 1
    %635 = vsyncpa [#allocation5], 1
    %s636 = scalar_lea.sflag [#allocation5], 1
    %637 = vsyncpa %s636, 1

</llo_original>
